<compile_context>
chip_gen: v6e
topology: v6e:2x2x1
jax: 0.10.0
libtpu: 0.0.40
codegen_flags: <defaults>
</compile_context>

<pallas_src>
import jax
import jax.numpy as jnp
from jax import lax
from jax.experimental import pallas as pl
from jax.experimental.pallas import tpu as pltpu


# ------------------------------ configuration --------------------------------
N, CIN, H, W = 2, 4, 16, 16        # input: NCHW (2, 4, 16, 16)
COUT = 128                         # out_channels (lane/sublane friendly)
KS, STRIDE, PAD = 3, 1, 1
BN_EPS = 1e-5

HW = H * W                         # 256 output pixels per image (lane-dense axis)
KIM = KS * KS * CIN                # 36 packed contraction depth (taps x CIN)
KTOT = KIM + 1                     # +1 ones-row so the folded BN shift rides the matmul
CHUNK = 128                        # pixels per MXU dot; 2 chunks per image


# --------------------------------- kernel ------------------------------------
def conv_bn_relu_kernel(lhs_ref, w_ref, o_ref):
    """Fused 3x3 conv (pad=1, stride=1) + folded-BN + ReLU for one image.

    lhs_ref : (KTOT, HW)   im2col (+ ones row) for one image; pixel axis lane-dense
    w_ref   : (COUT, KTOT) BN-scale-folded weights; last column = folded BN shift
    o_ref   : (COUT, HW)   output already in NC(H*W) layout -> no wrapper transpose
    """
    w = w_ref[...]                                            # (COUT, KTOT), resident
    for p0 in range(0, HW, CHUNK):                            # 2 iterations, unrolled
        blk = lhs_ref[:, p0:p0 + CHUNK]                       # (KTOT, CHUNK) static slice
        acc = jnp.dot(w, blk, preferred_element_type=jnp.float32)   # one MXU push chain
        o_ref[:, p0:p0 + CHUNK] = jnp.maximum(acc, 0.0)       # ReLU, unmasked stores


# -------------------------------- wrapper -------------------------------------
@jax.jit
def conv_layer_padding(x_nchw, params):
    w = params["w"]                                           # (COUT, CIN, KS, KS)
    gamma, beta = params["gamma"], params["beta"]
    mean, var = params["mean"], params["var"]

    # Fold eval-mode BatchNorm into the conv weights / bias (zero in-kernel cost).
    scale = gamma * lax.rsqrt(var + BN_EPS)                   # (COUT,)
    shift = beta - mean * scale
    wf = w * scale[:, None, None, None]                       # (COUT, CIN, KS, KS)
    # k = (dy*KS + dx)*CIN + c  ;  last column carries the BN shift (ones-row trick).
    wk = jnp.transpose(wf, (0, 2, 3, 1)).reshape(COUT, KIM)   # (COUT, 36)
    wk = jnp.concatenate([wk, shift[:, None]], axis=1)        # (COUT, 37)

    # Wrapper-side im2col straight from NCHW: pad halo, take 9 shifted views,
    # concatenate along the contraction axis, append the ones row.
    xp = jnp.pad(x_nchw, ((0, 0), (0, 0), (PAD, PAD), (PAD, PAD)))   # (N, CIN, 18, 18)
    taps = [xp[:, :, dy:dy + H, dx:dx + W].reshape(N, CIN, HW)
            for dy in range(KS) for dx in range(KS)]          # 9 x (N, CIN, 256)
    ones = jnp.ones((N, 1, HW), jnp.float32)
    lhs = jnp.concatenate(taps + [ones], axis=1)              # (N, 37, 256)

    flops = 2 * N * HW * KTOT * COUT
    bytes_accessed = 4 * (lhs.size + wk.size + N * COUT * HW)

    y = pl.pallas_call(
        conv_bn_relu_kernel,
        out_shape=jax.ShapeDtypeStruct((N, COUT, HW), jnp.float32),
        grid=(N,),
        in_specs=[
            pl.BlockSpec((None, KTOT, HW), lambda n: (n, 0, 0)),   # per-image im2col
            pl.BlockSpec((COUT, KTOT), lambda n: (0, 0)),          # weights, resident
        ],
        out_specs=pl.BlockSpec((None, COUT, HW), lambda n: (n, 0, 0)),
        compiler_params=pltpu.CompilerParams(dimension_semantics=("parallel",)),
        cost_estimate=pl.CostEstimate(flops=flops, transcendentals=0,
                                      bytes_accessed=bytes_accessed),
    )(lhs, wk)

    # Free reshape (last-dim split only, no transpose / no copy): (N, COUT, H, W).
    return y.reshape(N, COUT, H, W)


# ---------------------------- pure-JAX reference ------------------------------
def ref_forward(x_nchw, params):
    y = lax.conv_general_dilated(
        x_nchw, params["w"], window_strides=(STRIDE, STRIDE),
        padding=((PAD, PAD), (PAD, PAD)),
        dimension_numbers=("NCHW", "OIHW", "NCHW"))
    scale = params["gamma"] / jnp.sqrt(params["var"] + BN_EPS)
    shift = params["beta"] - params["mean"] * scale
    y = y * scale[None, :, None, None] + shift[None, :, None, None]
    return jnp.maximum(y, 0.0)                                # ReLU


# ----------------------------------- main --------------------------------------
if __name__ == "__main__":
    key = jax.random.PRNGKey(0)
    kx, kw, kg, kb, km, kv = jax.random.split(key, 6)

    x = jax.random.normal(kx, (N, CIN, H, W), jnp.float32)    # NCHW, like PyTorch
    params = dict(
        w=jax.random.normal(kw, (COUT, CIN, KS, KS), jnp.float32) * 0.1,
        gamma=jax.random.uniform(kg, (COUT,), jnp.float32, minval=0.5, maxval=1.5),
        beta=jax.random.normal(kb, (COUT,), jnp.float32) * 0.1,
        mean=jax.random.normal(km, (COUT,), jnp.float32) * 0.1,
        var=jax.random.uniform(kv, (COUT,), jnp.float32, minval=0.5, maxval=1.5),
    )

    out = jax.block_until_ready(conv_layer_padding(x, params))
    ref = ref_forward(x, params)

    assert out.shape == (N, COUT, H, W)
    max_err = float(jnp.max(jnp.abs(out - ref)))
    assert max_err < 1e-4, f"Pallas output mismatch vs JAX reference (max abs err {max_err})"

    print("KERNEL_OK")
</pallas_src>

<mosaic_0001>
module attributes {stable_mosaic.version = 11 : i64} {
  func.func @conv_bn_relu_kernel(%arg0: i32, %arg1: memref<1x37x256xf32, #tpu.memory_space<vmem>>, %arg2: memref<128x37xf32, #tpu.memory_space<vmem>>, %arg3: memref<1x128x256xf32, #tpu.memory_space<vmem>>) attributes {dimension_semantics = [#tpu.dimension_semantics<parallel>], iteration_bounds = array<i64: 2>, scalar_prefetch = 0 : i64, scratch_operands = 0 : i64, tpu.core_type = #tpu.core_type<tc>, window_params = [{transform_indices = @transform_0, window_bounds = array<i64: 1, 37, 256>}, {pipeline_mode = #tpu.pipeline_mode<synchronous>, transform_indices = @transform_1, window_bounds = array<i64: 128, 37>}, {transform_indices = @transform_2, window_bounds = array<i64: 1, 128, 256>}]} {
    %c0 = arith.constant 0 : index
    %c0_0 = arith.constant 0 : index
    %0 = vector.load %arg2[%c0, %c0_0] : memref<128x37xf32, #tpu.memory_space<vmem>>, vector<128x37xf32>
    %c0_1 = arith.constant 0 : index
    %c0_2 = arith.constant 0 : index
    %c0_3 = arith.constant 0 : index
    %1 = vector.load %arg1[%c0_1, %c0_2, %c0_3] : memref<1x37x256xf32, #tpu.memory_space<vmem>>, vector<1x37x128xf32>
    %2 = vector.shape_cast %1 : vector<1x37x128xf32> to vector<37x128xf32>
    %cst = arith.constant dense<0.000000e+00> : vector<128x128xf32>
    %3 = tpu.matmul %0, %2, %cst {dimension_numbers = #tpu.dot_dimension_numbers<[1], [0], [0], [1], [0, 0, 1, 1], [], []>} : vector<128x37xf32>, vector<37x128xf32>, vector<128x128xf32> -> vector<128x128xf32>
    %cst_4 = arith.constant 0.000000e+00 : f32
    %4 = vector.broadcast %cst_4 : f32 to vector<128x128xf32>
    %5 = arith.maximumf %3, %4 : vector<128x128xf32>
    %c0_5 = arith.constant 0 : index
    %c0_6 = arith.constant 0 : index
    %c0_7 = arith.constant 0 : index
    %6 = vector.load %arg3[%c0_5, %c0_6, %c0_7] : memref<1x128x256xf32, #tpu.memory_space<vmem>>, vector<1x128x128xf32>
    %7 = vector.shape_cast %6 : vector<1x128x128xf32> to vector<128x128xf32>
    %8 = vector.shape_cast %5 : vector<128x128xf32> to vector<1x128x128xf32>
    tpu.vector_store %arg3[%c0_5, %c0_6, %c0_7], %8 {strides = array<i32>} : memref<1x128x256xf32, #tpu.memory_space<vmem>>, vector<1x128x128xf32>,
    %c0_8 = arith.constant 0 : index
    %c0_9 = arith.constant 0 : index
    %c128 = arith.constant 128 : index
    %9 = vector.load %arg1[%c0_8, %c0_9, %c128] : memref<1x37x256xf32, #tpu.memory_space<vmem>>, vector<1x37x128xf32>
    %10 = vector.shape_cast %9 : vector<1x37x128xf32> to vector<37x128xf32>
    %cst_10 = arith.constant dense<0.000000e+00> : vector<128x128xf32>
    %11 = tpu.matmul %0, %10, %cst_10 {dimension_numbers = #tpu.dot_dimension_numbers<[1], [0], [0], [1], [0, 0, 1, 1], [], []>} : vector<128x37xf32>, vector<37x128xf32>, vector<128x128xf32> -> vector<128x128xf32>
    %cst_11 = arith.constant 0.000000e+00 : f32
    %12 = vector.broadcast %cst_11 : f32 to vector<128x128xf32>
    %13 = arith.maximumf %11, %12 : vector<128x128xf32>
    %c0_12 = arith.constant 0 : index
    %c0_13 = arith.constant 0 : index
    %c128_14 = arith.constant 128 : index
    %14 = vector.load %arg3[%c0_12, %c0_13, %c128_14] : memref<1x128x256xf32, #tpu.memory_space<vmem>>, vector<1x128x128xf32>
    %15 = vector.shape_cast %14 : vector<1x128x128xf32> to vector<128x128xf32>
    %16 = vector.shape_cast %13 : vector<128x128xf32> to vector<1x128x128xf32>
    tpu.vector_store %arg3[%c0_12, %c0_13, %c128_14], %16 {strides = array<i32>} : memref<1x128x256xf32, #tpu.memory_space<vmem>>, vector<1x128x128xf32>,
    return
  }
  func.func @transform_0(%arg0: i32) -> (i32, i32, i32) {
    %c0_i32 = arith.constant 0 : i32
    %c0_i32_0 = arith.constant 0 : i32
    %c0_i32_1 = arith.constant 0 : i32
    return %arg0, %c0_i32, %c0_i32_0 : i32, i32, i32
  }
  func.func @transform_1(%arg0: i32) -> (i32, i32) {
    %c0_i32 = arith.constant 0 : i32
    %c0_i32_0 = arith.constant 0 : i32
    %c0_i32_1 = arith.constant 0 : i32
    return %c0_i32, %c0_i32_0 : i32, i32
  }
  func.func @transform_2(%arg0: i32) -> (i32, i32, i32) {
    %c0_i32 = arith.constant 0 : i32
    %c0_i32_0 = arith.constant 0 : i32
    %c0_i32_1 = arith.constant 0 : i32
    return %arg0, %c0_i32, %c0_i32_0 : i32, i32, i32
  }
}

</mosaic_0001>

<llo_original>
// kernel: conv_layer_padding.1
$region0: #{conv_layer_padding.1}
  #allocation0 [shape = 'u32[]', space=smem, size = 0x4, offset = 0x4, fixed_abs, tag = 'smem constant byte address 0x4 - core index']
  #allocation1 [shape = 'u32[144,128]{1,0:T(1,128)}', space=vmem, size = 0x12000, scoped, tag = 'internal scratch']
  %s0 = inlined_call_operand.vmem [shape: f32[2,37,256], index: 0, kind: input, shape index: {}]
  %s1 = inlined_call_operand.vmem [shape: f32[128,37], index: 1, kind: input, shape index: {}]
  %s2 = inlined_call_operand.vmem [shape: f32[2,128,256], index: 2, kind: output, shape index: {}]
  %s3 = sld [smem:[#allocation0]]
  $region41: #{conv_layer_padding.1} parent=0
    _
  %s5 = ssub.s32 1, %s3
  %s6 = scalar_select 0, %s5, %s3
  loop: start=0, step=1, limit=4
  $region2: #{conv_layer_padding.1} parent=0 // loop_pre_header
    _
  $region3: #{conv_layer_padding.1} parent=0 // loop_header
    %s8 = sphi 0, %s12
    %p9 = scmp.ge.s32.totalorder %s8, 4
    %s18 = sphi 0, %s20
    %s21 = sphi 0, %s18
    %s22 = sphi 0, %s21
    %s38 = sphi 0, %s22
    %s42 = sphi 0, %s42
    %s44 = sphi 0, %s42
    %s45 = sphi 0, %s44
    %s59 = sphi 0, %s45
    %s65 = sphi 0, %s67
    %s68 = sphi 0, %s65
    %s69 = sphi 0, %s68
    %s85 = sphi 0, %s69
  $region4: #{conv_layer_padding.1} parent=0 // loop_header_branch
    %11 = sbr.rel (%p9) target = $region8
  $region5: #{conv_layer_padding.1} parent=0 // loop_body
    %s13 = ssub.s32 %s8, 1
    %s14 = ssub.s32 %s8, 2
    %s15 = sadd.s32 %s8, 1
    %s16 = ssub.s32 %s8, %s15
    %p17 = scmp.eq.s32.totalorder %s16, 0
    %s19 = sadd.s32 %s18, 1
    %s20 = scalar_select %p17, %s18, %s19
    %p23 = pneg %p17
    %p24 = scmp.eq.s32.totalorder %s8, 1
    %p25 = por %p23, %p24
    %p26 = scmp.ne.s32.totalorder %s18, %s21
    %p27 = scmp.eq.s32.totalorder %s8, 0
    %p28 = por %p26, %p27
    %p29 = scmp.ne.s32.totalorder %s18, %s21
    %p30 = scmp.eq.s32.totalorder %s13, 1
    %p31 = por %p29, %p30
    %p32 = scmp.ne.s32.totalorder %s21, %s22
    %p33 = scmp.eq.s32.totalorder %s13, 0
    %p34 = por %p32, %p33
    %p35 = scmp.ne.s32.totalorder %s21, %s22
    %p36 = scmp.eq.s32.totalorder %s14, 1
    %p37 = por %p35, %p36
    %p39 = scmp.ne.s32.totalorder %s22, %s38
    %p40 = scmp.eq.s32.totalorder %s14, 0
    %p41 = por %p39, %p40
    %s43 = sadd.s32 %s42, 1
    %p46 = scmp.eq.s32.totalorder %s8, 1
    %p47 = scmp.ne.s32.totalorder %s42, %s44
    %p48 = scmp.eq.s32.totalorder %s8, 0
    %p49 = por %p47, %p48
    %p50 = scmp.ne.s32.totalorder %s42, %s44
    %p51 = scmp.eq.s32.totalorder %s13, 1
    %p52 = por %p50, %p51
    %p53 = scmp.ne.s32.totalorder %s44, %s45
    %p54 = scmp.eq.s32.totalorder %s13, 0
    %p55 = por %p53, %p54
    %p56 = scmp.ne.s32.totalorder %s44, %s45
    %p57 = scmp.eq.s32.totalorder %s14, 1
    %p58 = por %p56, %p57
    %p60 = scmp.ne.s32.totalorder %s45, %s59
    %p61 = scmp.eq.s32.totalorder %s14, 0
    %p62 = por %p60, %p61
    %s63 = ssub.s32 %s8, %s15
    %p64 = scmp.eq.s32.totalorder %s63, 0
    %s66 = sadd.s32 %s65, 1
    %s67 = scalar_select %p64, %s65, %s66
    %p70 = pneg %p64
    %p71 = scmp.eq.s32.totalorder %s8, 1
    %p72 = por %p70, %p71
    %p73 = scmp.ne.s32.totalorder %s65, %s68
    %p74 = scmp.eq.s32.totalorder %s8, 0
    %p75 = por %p73, %p74
    %p76 = scmp.ne.s32.totalorder %s65, %s68
    %p77 = scmp.eq.s32.totalorder %s13, 1
    %p78 = por %p76, %p77
    %p79 = scmp.ne.s32.totalorder %s68, %s69
    %p80 = scmp.eq.s32.totalorder %s13, 0
    %p81 = por %p79, %p80
    %p82 = scmp.ne.s32.totalorder %s68, %s69
    %p83 = scmp.eq.s32.totalorder %s14, 1
    %p84 = por %p82, %p83
    %p86 = scmp.ne.s32.totalorder %s69, %s85
    %p87 = scmp.eq.s32.totalorder %s14, 0
    %p88 = por %p86, %p87
    %p89 = scmp.le.s32.totalorder 1, %s8
    %p90 = scmp.lt.s32.totalorder %s8, 3
    %p91 = pnand %p89, %p90
    %p92 = pneg %p91
    // Predicated region
    $region9: #{conv_layer_padding.1} parent=5 // pred_check
      _
    $region10: #{conv_layer_padding.1} parent=5 // pred_check_branch
      %94 = sbr.rel (%p91) target = $region12
    $region11: #{conv_layer_padding.1} parent=5 // pred_region
      %s95 = ssub.s32 %s8, 1
      // Predicated region
      $region13: #{conv_layer_padding.1} parent=11 // pred_check
        %p96 = pneg %p55
      $region14: #{conv_layer_padding.1} parent=11 // pred_check_branch
        %98 = sbr.rel (%p96) target = $region16
      $region15: #{conv_layer_padding.1} parent=11 // pred_region
        _
      $region16: #{conv_layer_padding.1} parent=11 // pred_fallthru
        _
    $region12: #{conv_layer_padding.1} parent=5 // pred_fallthru
      _
    %p99 = scmp.lt.s32.totalorder %s8, 2
    // Predicated region
    $region17: #{conv_layer_padding.1} parent=5 // pred_check
      %p100 = pneg %p99
    $region18: #{conv_layer_padding.1} parent=5 // pred_check_branch
      %102 = sbr.rel (%p100) target = $region20
    $region19: #{conv_layer_padding.1} parent=5 // pred_region
      // Predicated region
      $region21: #{conv_layer_padding.1} parent=19 // pred_check
        %p103 = pneg %p28
      $region22: #{conv_layer_padding.1} parent=19 // pred_check_branch
        %105 = sbr.rel (%p103) target = $region24
      $region23: #{conv_layer_padding.1} parent=19 // pred_region
        %p106 = scmp.lt.s32.totalorder %s8, 1
        %s107 = scalar_select %p106, %s8, 1
        %s108 = smul.addr %s107, 10
        %s109 = smul.addr %s108, 8
        %s110 = scalar_lea.vmem %s0, %s109
      $region24: #{conv_layer_padding.1} parent=19 // pred_fallthru
        _
    $region20: #{conv_layer_padding.1} parent=5 // pred_fallthru
      _
    %p111 = scmp.le.s32.totalorder 1, %s8
    %p112 = scmp.lt.s32.totalorder %s8, 3
    %p113 = pnand %p111, %p112
    %p114 = pneg %p113
    // Predicated region
    $region25: #{conv_layer_padding.1} parent=5 // pred_check
      _
    $region26: #{conv_layer_padding.1} parent=5 // pred_check_branch
      %116 = sbr.rel (%p113) target = $region28
    $region27: #{conv_layer_padding.1} parent=5 // pred_region
      %s117 = ssub.s32 %s8, 1
      %p118 = scmp.lt.s32.totalorder %s13, 1
      %s119 = scalar_select %p118, %s13, 1
      %s120 = smul.addr %s119, 10
      %s121 = smul.addr %s120, 8
      %s122 = scalar_lea.vmem %s0, %s121
      %p123 = pneg %p34
      %p124 = pneg %p31
      %p125 = pneg %p55
      %p126 = pneg %p52
      %p127 = pneg %p81
      %p128 = pneg %p78
      %p129 = scmp.lt.s32.totalorder %s13, 1
      %s130 = scalar_select %p129, %s13, 1
      %s131 = smul.addr %s130, 32
      %s132 = smul.addr %s131, 8
      %s133 = scalar_lea.vmem %s2, %s132
      %p134 = scmp.lt.s32.totalorder %s13, 1
      %s135 = scalar_select %p134, %s13, 1
      %s136 = smul.addr %s135, 10
      %s137 = smul.addr %s136, 8
      %s138 = scalar_lea.vmem %s0, %s137
      %p139 = scmp.lt.s32.totalorder %s13, 1
      %s140 = scalar_select %p139, %s13, 1
      %s141 = smul.addr %s140, 32
      %s142 = smul.addr %s141, 8
      %s143 = scalar_lea.vmem %s2, %s142
      %v144 = vld [vmem:[%s1] sm:$0xff]
      %v145 = vld [vmem:[%s1 + $0x8] sm:$0xff]
      %v146 = vld [vmem:[%s1 + $0x10] sm:$0xff]
      %v147 = vld [vmem:[%s1 + $0x18] sm:$0xff]
      %v148 = vld [vmem:[%s1 + $0x20] sm:$0xff]
      %v149 = vld [vmem:[%s1 + $0x28] sm:$0xff]
      %v150 = vld [vmem:[%s1 + $0x30] sm:$0xff]
      %v151 = vld [vmem:[%s1 + $0x38] sm:$0xff]
      %v152 = vld [vmem:[%s1 + $0x40] sm:$0xff]
      %v153 = vld [vmem:[%s1 + $0x48] sm:$0xff]
      %v154 = vld [vmem:[%s1 + $0x50] sm:$0xff]
      %v155 = vld [vmem:[%s1 + $0x58] sm:$0xff]
      %v156 = vld [vmem:[%s1 + $0x60] sm:$0xff]
      %v157 = vld [vmem:[%s1 + $0x68] sm:$0xff]
      %v158 = vld [vmem:[%s1 + $0x70] sm:$0xff]
      %v159 = vld [vmem:[%s1 + $0x78] sm:$0xff]
      %v160 = vld [vmem:[%s138] sm:$0xff]
      %v161 = vld [vmem:[%s138 + $0x10] sm:$0xff]
      %v162 = vld [vmem:[%s138 + $0x20] sm:$0xff]
      %v163 = vld [vmem:[%s138 + $0x30] sm:$0xff]
      %v164 = vld [vmem:[%s138 + $0x40] sm:$0x1f]
      %vm165 = vcmask 302080
      %v167 = vsel %vm165, %v144, 0
      %v170 = vsel %vm165, %v145, 0
      %v173 = vsel %vm165, %v146, 0
      %v176 = vsel %vm165, %v147, 0
      %v179 = vsel %vm165, %v148, 0
      %v182 = vsel %vm165, %v149, 0
      %v185 = vsel %vm165, %v150, 0
      %v188 = vsel %vm165, %v151, 0
      %v191 = vsel %vm165, %v152, 0
      %v194 = vsel %vm165, %v153, 0
      %v197 = vsel %vm165, %v154, 0
      %v200 = vsel %vm165, %v155, 0
      %v203 = vsel %vm165, %v156, 0
      %v206 = vsel %vm165, %v157, 0
      %v209 = vsel %vm165, %v158, 0
      %v212 = vsel %vm165, %v159, 0
      %vm214 = vcmask 1044480
      %v216 = vsel %vm214, %v164, 0
      %218 = vmatprep.subr.mxu0 0.0
      %219 = vmatpush1.msra.mxu0 0.0
      %220 = vmatprep.subr.mxu0 0.0
      %221 = vmatpush1.msra.mxu0 0.0
      %222 = vmatprep.subr.mxu0 0.0
      %223 = vmatpush1.msra.mxu0 0.0
      %224 = vmatprep.subr.mxu0 0.0
      %225 = vmatpush1.msra.mxu0 0.0
      %226 = vmatprep.subr.mxu0 0.0
      %227 = vmatpush1.msra.mxu0 0.0
      %228 = vmatprep.subr.mxu0 0.0
      %229 = vmatpush1.msra.mxu0 0.0
      %230 = vmatprep.subr.mxu0 0.0
      %231 = vmatpush1.msra.mxu0 0.0
      %232 = vmatprep.subr.mxu0 0.0
      %233 = vmatpush1.msra.mxu0 0.0
      %234 = vmatprep.subr.mxu0 0.0
      %235 = vmatpush1.msra.mxu0 0.0
      %236 = vmatprep.subr.mxu0 0.0
      %237 = vmatpush1.msra.mxu0 0.0
      %238 = vmatprep.subr.mxu0 0.0
      %239 = vmatpush1.msra.mxu0 0.0
      %240 = vmatprep.subr.mxu0 0.0
      %241 = vmatpush1.msra.mxu0 %v216
      %242 = vmatprep.subr.mxu0 0.0
      %243 = vmatpush1.msra.mxu0 %v163
      %244 = vmatprep.subr.mxu0 0.0
      %245 = vmatpush1.msra.mxu0 %v162
      %246 = vmatprep.subr.mxu0 0.0
      %247 = vmatpush1.msra.mxu0 %v161
      %248 = vmatprep.subr.mxu0 0.0
      %249 = vmatpush1.msra.mxu0 %v160
      %250 = vmatprep.subr.mxu0 0.0
      %251 = vmatpush2.msra.mxu0 0.0
      %252 = vmatprep.subr.mxu0 0.0
      %253 = vmatpush2.msra.mxu0 0.0
      %254 = vmatprep.subr.mxu0 0.0
      %255 = vmatpush2.msra.mxu0 0.0
      %256 = vmatprep.subr.mxu0 0.0
      %257 = vmatpush2.msra.mxu0 0.0
      %258 = vmatprep.subr.mxu0 0.0
      %259 = vmatpush2.msra.mxu0 0.0
      %260 = vmatprep.subr.mxu0 0.0
      %261 = vmatpush2.msra.mxu0 0.0
      %262 = vmatprep.subr.mxu0 0.0
      %263 = vmatpush2.msra.mxu0 0.0
      %264 = vmatprep.subr.mxu0 0.0
      %265 = vmatpush2.msra.mxu0 0.0
      %266 = vmatprep.subr.mxu0 0.0
      %267 = vmatpush2.msra.mxu0 0.0
      %268 = vmatprep.subr.mxu0 0.0
      %269 = vmatpush2.msra.mxu0 0.0
      %270 = vmatprep.subr.mxu0 0.0
      %271 = vmatpush2.msra.mxu0 0.0
      %272 = vmatprep.subr.mxu0 0.0
      %273 = vmatpush2.msra.mxu0 0.0
      %274 = vmatprep.subr.mxu0 0.0
      %275 = vmatpush2.msra.mxu0 0.0
      %276 = vmatprep.subr.mxu0 0.0
      %277 = vmatpush2.msra.mxu0 0.0
      %278 = vmatprep.subr.mxu0 0.0
      %279 = vmatpush2.msra.mxu0 0.0
      %280 = vmatprep.subr.mxu0 0.0
      %281 = vmatpush2.msra.mxu0 0.0
      %282 = vmatprep.mubr.f32.mxu0 0.0
      %283 = vmatmul.mubr.f32.gmra.mxu0 %v167
      %v284 = vpop.f32.mrf.mxu0
      %v285 = vadd.f32 0.0, %v284
      %v286 = vpop.f32.mrf.mxu0
      %287 = vmatprep.mubr.f32.mxu0 0.0
      %288 = vmatmul.mubr.f32.gmra.mxu0 %v170
      %v289 = vpop.f32.mrf.mxu0
      %v290 = vadd.f32 0.0, %v289
      %v291 = vpop.f32.mrf.mxu0
      %292 = vmatprep.mubr.f32.mxu0 0.0
      %293 = vmatmul.mubr.f32.gmra.mxu0 %v173
      %v294 = vpop.f32.mrf.mxu0
      %v295 = vadd.f32 0.0, %v294
      %v296 = vpop.f32.mrf.mxu0
      %297 = vmatprep.mubr.f32.mxu0 0.0
      %298 = vmatmul.mubr.f32.gmra.mxu0 %v176
      %v299 = vpop.f32.mrf.mxu0
      %v300 = vadd.f32 0.0, %v299
      %v301 = vpop.f32.mrf.mxu0
      %302 = vmatprep.mubr.f32.mxu0 0.0
      %303 = vmatmul.mubr.f32.gmra.mxu0 %v179
      %v304 = vpop.f32.mrf.mxu0
      %v305 = vadd.f32 0.0, %v304
      %v306 = vpop.f32.mrf.mxu0
      %307 = vmatprep.mubr.f32.mxu0 0.0
      %308 = vmatmul.mubr.f32.gmra.mxu0 %v182
      %v309 = vpop.f32.mrf.mxu0
      %v310 = vadd.f32 0.0, %v309
      %v311 = vpop.f32.mrf.mxu0
      %312 = vmatprep.mubr.f32.mxu0 0.0
      %313 = vmatmul.mubr.f32.gmra.mxu0 %v185
      %v314 = vpop.f32.mrf.mxu0
      %v315 = vadd.f32 0.0, %v314
      %v316 = vpop.f32.mrf.mxu0
      %317 = vmatprep.mubr.f32.mxu0 0.0
      %318 = vmatmul.mubr.f32.gmra.mxu0 %v188
      %v319 = vpop.f32.mrf.mxu0
      %v320 = vadd.f32 0.0, %v319
      %v321 = vpop.f32.mrf.mxu0
      %322 = vmatprep.mubr.f32.mxu0 0.0
      %323 = vmatmul.mubr.f32.gmra.mxu0 %v191
      %v324 = vpop.f32.mrf.mxu0
      %v325 = vadd.f32 0.0, %v324
      %v326 = vpop.f32.mrf.mxu0
      %327 = vmatprep.mubr.f32.mxu0 0.0
      %328 = vmatmul.mubr.f32.gmra.mxu0 %v194
      %v329 = vpop.f32.mrf.mxu0
      %v330 = vadd.f32 0.0, %v329
      %v331 = vpop.f32.mrf.mxu0
      %332 = vmatprep.mubr.f32.mxu0 0.0
      %333 = vmatmul.mubr.f32.gmra.mxu0 %v197
      %v334 = vpop.f32.mrf.mxu0
      %v335 = vadd.f32 0.0, %v334
      %v336 = vpop.f32.mrf.mxu0
      %337 = vmatprep.mubr.f32.mxu0 0.0
      %338 = vmatmul.mubr.f32.gmra.mxu0 %v200
      %v339 = vpop.f32.mrf.mxu0
      %v340 = vadd.f32 0.0, %v339
      %v341 = vpop.f32.mrf.mxu0
      %342 = vmatprep.mubr.f32.mxu0 0.0
      %343 = vmatmul.mubr.f32.gmra.mxu0 %v203
      %v344 = vpop.f32.mrf.mxu0
      %v345 = vadd.f32 0.0, %v344
      %v346 = vpop.f32.mrf.mxu0
      %347 = vmatprep.mubr.f32.mxu0 0.0
      %348 = vmatmul.mubr.f32.gmra.mxu0 %v206
      %v349 = vpop.f32.mrf.mxu0
      %v350 = vadd.f32 0.0, %v349
      %v351 = vpop.f32.mrf.mxu0
      %352 = vmatprep.mubr.f32.mxu0 0.0
      %353 = vmatmul.mubr.f32.gmra.mxu0 %v209
      %v354 = vpop.f32.mrf.mxu0
      %v355 = vadd.f32 0.0, %v354
      %v356 = vpop.f32.mrf.mxu0
      %357 = vmatprep.mubr.f32.mxu0 0.0
      %358 = vmatmul.mubr.f32.gmra.mxu0 %v212
      %v359 = vpop.f32.mrf.mxu0
      %v360 = vadd.f32 0.0, %v359
      %v361 = vpop.f32.mrf.mxu0
      %362 = vdwg.mxu0
      %v363 = vmax.f32 %v285, 0.0
      %v364 = vmax.f32 %v290, 0.0
      %v365 = vmax.f32 %v295, 0.0
      %v366 = vmax.f32 %v300, 0.0
      %v367 = vmax.f32 %v305, 0.0
      %v368 = vmax.f32 %v310, 0.0
      %v369 = vmax.f32 %v315, 0.0
      %v370 = vmax.f32 %v320, 0.0
      %v371 = vmax.f32 %v325, 0.0
      %v372 = vmax.f32 %v330, 0.0
      %v373 = vmax.f32 %v335, 0.0
      %v374 = vmax.f32 %v340, 0.0
      %v375 = vmax.f32 %v345, 0.0
      %v376 = vmax.f32 %v350, 0.0
      %v377 = vmax.f32 %v355, 0.0
      %v378 = vmax.f32 %v360, 0.0
      %379 = vst [vmem:[%s143] sm:$0xff] %v363
      %380 = vst [vmem:[%s143 + $0x10] sm:$0xff] %v364
      %381 = vst [vmem:[%s143 + $0x20] sm:$0xff] %v365
      %382 = vst [vmem:[%s143 + $0x30] sm:$0xff] %v366
      %383 = vst [vmem:[%s143 + $0x40] sm:$0xff] %v367
      %384 = vst [vmem:[%s143 + $0x50] sm:$0xff] %v368
      %385 = vst [vmem:[%s143 + $0x60] sm:$0xff] %v369
      %386 = vst [vmem:[%s143 + $0x70] sm:$0xff] %v370
      %387 = vst [vmem:[%s143 + $0x80] sm:$0xff] %v371
      %388 = vst [vmem:[%s143 + $0x90] sm:$0xff] %v372
      %389 = vst [vmem:[%s143 + $0xa0] sm:$0xff] %v373
      %390 = vst [vmem:[%s143 + $0xb0] sm:$0xff] %v374
      %391 = vst [vmem:[%s143 + $0xc0] sm:$0xff] %v375
      %392 = vst [vmem:[%s143 + $0xd0] sm:$0xff] %v376
      %393 = vst [vmem:[%s143 + $0xe0] sm:$0xff] %v377
      %394 = vst [vmem:[%s143 + $0xf0] sm:$0xff] %v378
      %v395 = vld [vmem:[%s138 + $0x8] sm:$0xff]
      %v396 = vld [vmem:[%s138 + $0x18] sm:$0xff]
      %v397 = vld [vmem:[%s138 + $0x28] sm:$0xff]
      %v398 = vld [vmem:[%s138 + $0x38] sm:$0xff]
      %v399 = vld [vmem:[%s138 + $0x48] sm:$0x1f]
      %v401 = vsel %vm214, %v399, 0
      %403 = vmatprep.subr.mxu0 0.0
      %404 = vmatpush1.msra.mxu0 0.0
      %405 = vmatprep.subr.mxu0 0.0
      %406 = vmatpush1.msra.mxu0 0.0
      %407 = vmatprep.subr.mxu0 0.0
      %408 = vmatpush1.msra.mxu0 0.0
      %409 = vmatprep.subr.mxu0 0.0
      %410 = vmatpush1.msra.mxu0 0.0
      %411 = vmatprep.subr.mxu0 0.0
      %412 = vmatpush1.msra.mxu0 0.0
      %413 = vmatprep.subr.mxu0 0.0
      %414 = vmatpush1.msra.mxu0 0.0
      %415 = vmatprep.subr.mxu0 0.0
      %416 = vmatpush1.msra.mxu0 0.0
      %417 = vmatprep.subr.mxu0 0.0
      %418 = vmatpush1.msra.mxu0 0.0
      %419 = vmatprep.subr.mxu0 0.0
      %420 = vmatpush1.msra.mxu0 0.0
      %421 = vmatprep.subr.mxu0 0.0
      %422 = vmatpush1.msra.mxu0 0.0
      %423 = vmatprep.subr.mxu0 0.0
      %424 = vmatpush1.msra.mxu0 0.0
      %425 = vmatprep.subr.mxu0 0.0
      %426 = vmatpush1.msra.mxu0 %v401
      %427 = vmatprep.subr.mxu0 0.0
      %428 = vmatpush1.msra.mxu0 %v398
      %429 = vmatprep.subr.mxu0 0.0
      %430 = vmatpush1.msra.mxu0 %v397
      %431 = vmatprep.subr.mxu0 0.0
      %432 = vmatpush1.msra.mxu0 %v396
      %433 = vmatprep.subr.mxu0 0.0
      %434 = vmatpush1.msra.mxu0 %v395
      %435 = vmatprep.subr.mxu0 0.0
      %436 = vmatpush2.msra.mxu0 0.0
      %437 = vmatprep.subr.mxu0 0.0
      %438 = vmatpush2.msra.mxu0 0.0
      %439 = vmatprep.subr.mxu0 0.0
      %440 = vmatpush2.msra.mxu0 0.0
      %441 = vmatprep.subr.mxu0 0.0
      %442 = vmatpush2.msra.mxu0 0.0
      %443 = vmatprep.subr.mxu0 0.0
      %444 = vmatpush2.msra.mxu0 0.0
      %445 = vmatprep.subr.mxu0 0.0
      %446 = vmatpush2.msra.mxu0 0.0
      %447 = vmatprep.subr.mxu0 0.0
      %448 = vmatpush2.msra.mxu0 0.0
      %449 = vmatprep.subr.mxu0 0.0
      %450 = vmatpush2.msra.mxu0 0.0
      %451 = vmatprep.subr.mxu0 0.0
      %452 = vmatpush2.msra.mxu0 0.0
      %453 = vmatprep.subr.mxu0 0.0
      %454 = vmatpush2.msra.mxu0 0.0
      %455 = vmatprep.subr.mxu0 0.0
      %456 = vmatpush2.msra.mxu0 0.0
      %457 = vmatprep.subr.mxu0 0.0
      %458 = vmatpush2.msra.mxu0 0.0
      %459 = vmatprep.subr.mxu0 0.0
      %460 = vmatpush2.msra.mxu0 0.0
      %461 = vmatprep.subr.mxu0 0.0
      %462 = vmatpush2.msra.mxu0 0.0
      %463 = vmatprep.subr.mxu0 0.0
      %464 = vmatpush2.msra.mxu0 0.0
      %465 = vmatprep.subr.mxu0 0.0
      %466 = vmatpush2.msra.mxu0 0.0
      %467 = vmatprep.mubr.f32.mxu0 0.0
      %468 = vmatmul.mubr.f32.gmra.mxu0 %v167
      %v469 = vpop.f32.mrf.mxu0
      %v470 = vadd.f32 0.0, %v469
      %v471 = vpop.f32.mrf.mxu0
      %472 = vmatprep.mubr.f32.mxu0 0.0
      %473 = vmatmul.mubr.f32.gmra.mxu0 %v170
      %v474 = vpop.f32.mrf.mxu0
      %v475 = vadd.f32 0.0, %v474
      %v476 = vpop.f32.mrf.mxu0
      %477 = vmatprep.mubr.f32.mxu0 0.0
      %478 = vmatmul.mubr.f32.gmra.mxu0 %v173
      %v479 = vpop.f32.mrf.mxu0
      %v480 = vadd.f32 0.0, %v479
      %v481 = vpop.f32.mrf.mxu0
      %482 = vmatprep.mubr.f32.mxu0 0.0
      %483 = vmatmul.mubr.f32.gmra.mxu0 %v176
      %v484 = vpop.f32.mrf.mxu0
      %v485 = vadd.f32 0.0, %v484
      %v486 = vpop.f32.mrf.mxu0
      %487 = vmatprep.mubr.f32.mxu0 0.0
      %488 = vmatmul.mubr.f32.gmra.mxu0 %v179
      %v489 = vpop.f32.mrf.mxu0
      %v490 = vadd.f32 0.0, %v489
      %v491 = vpop.f32.mrf.mxu0
      %492 = vmatprep.mubr.f32.mxu0 0.0
      %493 = vmatmul.mubr.f32.gmra.mxu0 %v182
      %v494 = vpop.f32.mrf.mxu0
      %v495 = vadd.f32 0.0, %v494
      %v496 = vpop.f32.mrf.mxu0
      %497 = vmatprep.mubr.f32.mxu0 0.0
      %498 = vmatmul.mubr.f32.gmra.mxu0 %v185
      %v499 = vpop.f32.mrf.mxu0
      %v500 = vadd.f32 0.0, %v499
      %v501 = vpop.f32.mrf.mxu0
      %502 = vmatprep.mubr.f32.mxu0 0.0
      %503 = vmatmul.mubr.f32.gmra.mxu0 %v188
      %v504 = vpop.f32.mrf.mxu0
      %v505 = vadd.f32 0.0, %v504
      %v506 = vpop.f32.mrf.mxu0
      %507 = vmatprep.mubr.f32.mxu0 0.0
      %508 = vmatmul.mubr.f32.gmra.mxu0 %v191
      %v509 = vpop.f32.mrf.mxu0
      %v510 = vadd.f32 0.0, %v509
      %v511 = vpop.f32.mrf.mxu0
      %512 = vmatprep.mubr.f32.mxu0 0.0
      %513 = vmatmul.mubr.f32.gmra.mxu0 %v194
      %v514 = vpop.f32.mrf.mxu0
      %v515 = vadd.f32 0.0, %v514
      %v516 = vpop.f32.mrf.mxu0
      %517 = vmatprep.mubr.f32.mxu0 0.0
      %518 = vmatmul.mubr.f32.gmra.mxu0 %v197
      %v519 = vpop.f32.mrf.mxu0
      %v520 = vadd.f32 0.0, %v519
      %v521 = vpop.f32.mrf.mxu0
      %522 = vmatprep.mubr.f32.mxu0 0.0
      %523 = vmatmul.mubr.f32.gmra.mxu0 %v200
      %v524 = vpop.f32.mrf.mxu0
      %v525 = vadd.f32 0.0, %v524
      %v526 = vpop.f32.mrf.mxu0
      %527 = vmatprep.mubr.f32.mxu0 0.0
      %528 = vmatmul.mubr.f32.gmra.mxu0 %v203
      %v529 = vpop.f32.mrf.mxu0
      %v530 = vadd.f32 0.0, %v529
      %v531 = vpop.f32.mrf.mxu0
      %532 = vmatprep.mubr.f32.mxu0 0.0
      %533 = vmatmul.mubr.f32.gmra.mxu0 %v206
      %v534 = vpop.f32.mrf.mxu0
      %v535 = vadd.f32 0.0, %v534
      %v536 = vpop.f32.mrf.mxu0
      %537 = vmatprep.mubr.f32.mxu0 0.0
      %538 = vmatmul.mubr.f32.gmra.mxu0 %v209
      %v539 = vpop.f32.mrf.mxu0
      %v540 = vadd.f32 0.0, %v539
      %v541 = vpop.f32.mrf.mxu0
      %542 = vmatprep.mubr.f32.mxu0 0.0
      %543 = vmatmul.mubr.f32.gmra.mxu0 %v212
      %v544 = vpop.f32.mrf.mxu0
      %v545 = vadd.f32 0.0, %v544
      %v546 = vpop.f32.mrf.mxu0
      %547 = vdwg.mxu0
      %v548 = vmax.f32 %v470, 0.0
      %v549 = vmax.f32 %v475, 0.0
      %v550 = vmax.f32 %v480, 0.0
      %v551 = vmax.f32 %v485, 0.0
      %v552 = vmax.f32 %v490, 0.0
      %v553 = vmax.f32 %v495, 0.0
      %v554 = vmax.f32 %v500, 0.0
      %v555 = vmax.f32 %v505, 0.0
      %v556 = vmax.f32 %v510, 0.0
      %v557 = vmax.f32 %v515, 0.0
      %v558 = vmax.f32 %v520, 0.0
      %v559 = vmax.f32 %v525, 0.0
      %v560 = vmax.f32 %v530, 0.0
      %v561 = vmax.f32 %v535, 0.0
      %v562 = vmax.f32 %v540, 0.0
      %v563 = vmax.f32 %v545, 0.0
      %564 = vst [vmem:[%s143 + $0x8] sm:$0xff] %v548
      %565 = vst [vmem:[%s143 + $0x18] sm:$0xff] %v549
      %566 = vst [vmem:[%s143 + $0x28] sm:$0xff] %v550
      %567 = vst [vmem:[%s143 + $0x38] sm:$0xff] %v551
      %568 = vst [vmem:[%s143 + $0x48] sm:$0xff] %v552
      %569 = vst [vmem:[%s143 + $0x58] sm:$0xff] %v553
      %570 = vst [vmem:[%s143 + $0x68] sm:$0xff] %v554
      %571 = vst [vmem:[%s143 + $0x78] sm:$0xff] %v555
      %572 = vst [vmem:[%s143 + $0x88] sm:$0xff] %v556
      %573 = vst [vmem:[%s143 + $0x98] sm:$0xff] %v557
      %574 = vst [vmem:[%s143 + $0xa8] sm:$0xff] %v558
      %575 = vst [vmem:[%s143 + $0xb8] sm:$0xff] %v559
      %576 = vst [vmem:[%s143 + $0xc8] sm:$0xff] %v560
      %577 = vst [vmem:[%s143 + $0xd8] sm:$0xff] %v561
      %578 = vst [vmem:[%s143 + $0xe8] sm:$0xff] %v562
      %579 = vst [vmem:[%s143 + $0xf8] sm:$0xff] %v563
      %p580 = scmp.lt.s32.totalorder %s13, 1
      %s581 = scalar_select %p580, %s13, 1
      %s582 = smul.addr %s581, 32
      %s583 = smul.addr %s582, 8
      %s584 = scalar_lea.vmem %s2, %s583
      // Predicated region
      $region29: #{conv_layer_padding.1} parent=27 // pred_check
        %p585 = pneg %p78
      $region30: #{conv_layer_padding.1} parent=27 // pred_check_branch
        %587 = sbr.rel (%p585) target = $region32
      $region31: #{conv_layer_padding.1} parent=27 // pred_region
        _
      $region32: #{conv_layer_padding.1} parent=27 // pred_fallthru
        _
    $region28: #{conv_layer_padding.1} parent=5 // pred_fallthru
      _
    %p588 = scmp.le.s32.totalorder 2, %s8
    // Predicated region
    $region33: #{conv_layer_padding.1} parent=5 // pred_check
      %p589 = pneg %p588
    $region34: #{conv_layer_padding.1} parent=5 // pred_check_branch
      %591 = sbr.rel (%p589) target = $region36
    $region35: #{conv_layer_padding.1} parent=5 // pred_region
      %s592 = ssub.s32 %s8, 2
      // Predicated region
      $region37: #{conv_layer_padding.1} parent=35 // pred_check
        %p593 = pneg %p84
      $region38: #{conv_layer_padding.1} parent=35 // pred_check_branch
        %595 = sbr.rel (%p593) target = $region40
      $region39: #{conv_layer_padding.1} parent=35 // pred_region
        %p596 = scmp.lt.s32.totalorder %s14, 1
        %s597 = scalar_select %p596, %s14, 1
        %s598 = smul.addr %s597, 32
        %s599 = smul.addr %s598, 8
        %s600 = scalar_lea.vmem %s2, %s599
      $region40: #{conv_layer_padding.1} parent=35 // pred_fallthru
        _
    $region36: #{conv_layer_padding.1} parent=5 // pred_fallthru
      _
  $region6: #{conv_layer_padding.1} parent=0 // loop_footer
    %s12 = sadd.s32 1, %s8
  $region7: #{conv_layer_padding.1} parent=0 // loop_footer_branch
    %7 = sbr.rel target = $region3
  $region8: #{conv_layer_padding.1} parent=0 // loop_exit
    _

</llo_original>
